<compile_context>
chip_gen: v5e
topology: v5e:2x2
jax: 0.10.0
libtpu: 0.0.40
codegen_flags: <defaults>
</compile_context>

<pallas_src>
import functools

import jax
import jax.numpy as jnp
from jax.experimental import pallas as pl
from jax.experimental.pallas import tpu as pltpu


# ----------------------------- Pallas kernel -------------------------------

def _layernorm_kernel(x_ref, a_ref, b_ref, o_ref, *, eps, inv_d, inv_dm1):
    """One (TR, D) row-tile of LayerNorm. Reduction is over the lane axis."""
    x = x_ref[...].astype(jnp.float32)                       # (TR, D)
    # Single statistics sweep: sum and sum-of-squares together.
    s = jnp.sum(x, axis=-1, keepdims=True)                   # (TR, 1)
    ss = jnp.sum(x * x, axis=-1, keepdims=True)               # (TR, 1)
    mean = s * inv_d
    # Unbiased variance: (sumsq - D*mean^2) / (D-1); clamp tiny negative
    # cancellation residue before sqrt.
    var = jnp.maximum(ss - mean * s, 0.0) * inv_dm1
    std = jnp.sqrt(var)
    # Module adds eps to std (not to var under the sqrt). Exact reciprocal to
    # hold 1e-4 tolerance; the divide is not on the HBM-bound critical path.
    inv = pl.reciprocal(std + eps, approx=False)
    a = a_ref[...].astype(jnp.float32)                        # (1, D), resident
    b = b_ref[...].astype(jnp.float32)                        # (1, D), resident
    o_ref[...] = (a * ((x - mean) * inv) + b).astype(o_ref.dtype)


# ------------------------------ JAX wrapper ---------------------------------

def _choose_row_tile(rows, d, itemsize, target_bytes=8 << 20):
    """Biggest row tile ~target_bytes, rounded to the dtype's native sublane
    packing (8 rows for f32, 16 for bf16, 32 for int8/fp8)."""
    mult = 8 * max(1, 4 // max(1, itemsize))          # native sublane packing
    tr = (target_bytes // max(1, d * itemsize)) // mult * mult
    tr = max(mult, int(tr))
    if rows <= tr:
        return rows          # block == full array dim: always a legal shape
    return tr


def pallas_layernorm(x, a_2, b_2, eps=1e-6, row_tile=None):
    """x: (..., D); a_2, b_2: (D,). Returns same shape/dtype as x."""
    orig_shape = x.shape
    d = orig_shape[-1]
    rows = 1
    for s in orig_shape[:-1]:
        rows *= s
    x2d = x.reshape(rows, d)
    itemsize = jnp.dtype(x.dtype).itemsize

    if row_tile is None:
        row_tile = _choose_row_tile(rows, d, itemsize)
    row_tile = min(int(row_tile), rows)

    # VMEM budget: 2 input bufs + 2 output bufs of one tile, resident (1, D)
    # params (double-buffered, tiny) plus headroom. Cap at 48 MiB so it stays
    # well inside v7x's 64 MiB physical VMEM (v5e/v6e have 128 MiB physical).
    tile_bytes = row_tile * d * itemsize
    param_bytes = 4 * d * itemsize
    vmem_limit = max(32 << 20, 4 * tile_bytes + param_bytes + (4 << 20))
    vmem_limit = min(vmem_limit, 48 << 20)

    grid = (pl.cdiv(rows, row_tile),)
    kernel = functools.partial(
        _layernorm_kernel,
        eps=float(eps),
        inv_d=1.0 / float(d),
        inv_dm1=1.0 / float(max(d - 1, 1)),
    )

    # Advisory cost hint: pure HBM streaming (read x, write out) + light VPU.
    cost = pl.CostEstimate(
        flops=8 * rows * d,
        transcendentals=rows,
        bytes_accessed=2 * rows * d * itemsize + 2 * d * itemsize,
    )

    # TODO(synk): if production D is not a multiple of 128, pad/fold the
    # feature dim in the wrapper (with masked stats) to keep stores lane-dense.
    out2d = pl.pallas_call(
        kernel,
        out_shape=jax.ShapeDtypeStruct((rows, d), x.dtype),
        grid_spec=pl.GridSpec(
            grid=grid,
            in_specs=[
                pl.BlockSpec((row_tile, d), lambda i: (i, 0)),   # x row tile
                pl.BlockSpec((1, d), lambda i: (0, 0)),          # a_2 resident
                pl.BlockSpec((1, d), lambda i: (0, 0)),          # b_2 resident
            ],
            out_specs=pl.BlockSpec((row_tile, d), lambda i: (i, 0)),
        ),
        compiler_params=pltpu.CompilerParams(
            # Rows are independent: lets v7x shard tiles across its 2 TCs.
            dimension_semantics=("parallel",),
            vmem_limit_bytes=int(vmem_limit),
        ),
        cost_estimate=cost,
    )(x2d, a_2.reshape(1, d), b_2.reshape(1, d))
    return out2d.reshape(orig_shape)


# ------------------------------ reference -----------------------------------

def reference_layernorm(x, a_2, b_2, eps=1e-6):
    xf = x.astype(jnp.float32)
    mean = jnp.mean(xf, axis=-1, keepdims=True)
    std = jnp.std(xf, axis=-1, keepdims=True, ddof=1)     # unbiased, like torch
    out = a_2.astype(jnp.float32) * (xf - mean) / (std + eps) + b_2.astype(jnp.float32)
    return out.astype(x.dtype)


if __name__ == "__main__":
    key = jax.random.PRNGKey(0)
    k1, k2 = jax.random.split(key)

    # Small shape consistent with transformer usage: (batch, seq, features).
    B, S, D = 2, 8, 128                    # D multiple of 128 -> lane-dense stores
    x = jax.random.normal(k1, (B, S, D), dtype=jnp.float32)
    a_2 = jnp.ones((D,), jnp.float32) + 0.01 * jnp.arange(D, dtype=jnp.float32) / D
    b_2 = 0.001 * jnp.arange(D, dtype=jnp.float32)

    out = jax.block_until_ready(pallas_layernorm(x, a_2, b_2, eps=1e-6))
    ref = reference_layernorm(x, a_2, b_2, eps=1e-6)
    assert out.shape == x.shape
    assert jnp.allclose(out, ref, atol=1e-4, rtol=1e-4), \
        float(jnp.max(jnp.abs(out - ref)))

    # A second case that exercises multi-block row tiling (4 pipelined tiles).
    x_big = jax.random.normal(k2, (4, 256, D), dtype=jnp.float32)
    out_big = jax.block_until_ready(
        pallas_layernorm(x_big, a_2, b_2, eps=1e-6, row_tile=256))
    ref_big = reference_layernorm(x_big, a_2, b_2, eps=1e-6)
    assert jnp.allclose(out_big, ref_big, atol=1e-4, rtol=1e-4), \
        float(jnp.max(jnp.abs(out_big - ref_big)))

    # Also exercise the auto tile-size path on a bf16 input (16-row packing).
    x_bf = jax.random.normal(k2, (2, 64, D), dtype=jnp.bfloat16)
    out_bf = jax.block_until_ready(pallas_layernorm(x_bf, a_2, b_2, eps=1e-6))
    ref_bf = reference_layernorm(x_bf, a_2, b_2, eps=1e-6)
    assert jnp.allclose(out_bf.astype(jnp.float32), ref_bf.astype(jnp.float32),
                        atol=2e-2, rtol=2e-2), \
        float(jnp.max(jnp.abs(out_bf.astype(jnp.float32) - ref_bf.astype(jnp.float32))))

    print("KERNEL_OK")
</pallas_src>

<mosaic_0001>
module attributes {stable_mosaic.version = 11 : i64} {
  func.func @_layernorm_kernel(%arg0: i32, %arg1: memref<16x128xf32, #tpu.memory_space<vmem>>, %arg2: memref<1x128xf32, #tpu.memory_space<vmem>>, %arg3: memref<1x128xf32, #tpu.memory_space<vmem>>, %arg4: memref<16x128xf32, #tpu.memory_space<vmem>>) attributes {dimension_semantics = [#tpu.dimension_semantics<parallel>], iteration_bounds = array<i64: 1>, scalar_prefetch = 0 : i64, scratch_operands = 0 : i64, tpu.core_type = #tpu.core_type<tc>, window_params = [{transform_indices = @transform_0, window_bounds = array<i64: 16, 128>}, {pipeline_mode = #tpu.pipeline_mode<synchronous>, transform_indices = @transform_1, window_bounds = array<i64: 1, 128>}, {pipeline_mode = #tpu.pipeline_mode<synchronous>, transform_indices = @transform_2, window_bounds = array<i64: 1, 128>}, {transform_indices = @transform_3, window_bounds = array<i64: 16, 128>}]} {
    %c0 = arith.constant 0 : index
    %c0_0 = arith.constant 0 : index
    %0 = vector.load %arg1[%c0, %c0_0] : memref<16x128xf32, #tpu.memory_space<vmem>>, vector<16x128xf32>
    %cst = arith.constant dense<0.000000e+00> : vector<16xf32>
    %1 = vector.multi_reduction <add>, %0, %cst [1] : vector<16x128xf32> to vector<16xf32>
    %2 = vector.shape_cast %1 : vector<16xf32> to vector<16x1xf32>
    %3 = arith.mulf %0, %0 : vector<16x128xf32>
    %cst_1 = arith.constant dense<0.000000e+00> : vector<16xf32>
    %4 = vector.multi_reduction <add>, %3, %cst_1 [1] : vector<16x128xf32> to vector<16xf32>
    %5 = vector.shape_cast %4 : vector<16xf32> to vector<16x1xf32>
    %cst_2 = arith.constant 7.812500e-03 : f32
    %6 = vector.broadcast %cst_2 : f32 to vector<16x1xf32>
    %7 = arith.mulf %2, %6 : vector<16x1xf32>
    %8 = arith.mulf %7, %2 : vector<16x1xf32>
    %9 = arith.subf %5, %8 : vector<16x1xf32>
    %cst_3 = arith.constant 0.000000e+00 : f32
    %10 = vector.broadcast %cst_3 : f32 to vector<16x1xf32>
    %11 = arith.maximumf %9, %10 : vector<16x1xf32>
    %cst_4 = arith.constant 0.00787401571 : f32
    %12 = vector.broadcast %cst_4 : f32 to vector<16x1xf32>
    %13 = arith.mulf %11, %12 : vector<16x1xf32>
    %14 = math.sqrt %13 : vector<16x1xf32>
    %cst_5 = arith.constant 9.99999997E-7 : f32
    %15 = vector.broadcast %cst_5 : f32 to vector<16x1xf32>
    %16 = arith.addf %14, %15 : vector<16x1xf32>
    %17 = tpu.reciprocal %16 : vector<16x1xf32> -> vector<16x1xf32>
    %c0_6 = arith.constant 0 : index
    %c0_7 = arith.constant 0 : index
    %18 = vector.load %arg2[%c0_6, %c0_7] : memref<1x128xf32, #tpu.memory_space<vmem>>, vector<1x128xf32>
    %c0_8 = arith.constant 0 : index
    %c0_9 = arith.constant 0 : index
    %19 = vector.load %arg3[%c0_8, %c0_9] : memref<1x128xf32, #tpu.memory_space<vmem>>, vector<1x128xf32>
    %20 = vector.broadcast %7 : vector<16x1xf32> to vector<16x128xf32>
    %21 = arith.subf %0, %20 : vector<16x128xf32>
    %22 = vector.broadcast %17 : vector<16x1xf32> to vector<16x128xf32>
    %23 = arith.mulf %21, %22 : vector<16x128xf32>
    %24 = vector.broadcast %18 : vector<1x128xf32> to vector<16x128xf32>
    %25 = arith.mulf %24, %23 : vector<16x128xf32>
    %26 = vector.broadcast %19 : vector<1x128xf32> to vector<16x128xf32>
    %27 = arith.addf %25, %26 : vector<16x128xf32>
    %c0_10 = arith.constant 0 : index
    %c0_11 = arith.constant 0 : index
    %28 = vector.load %arg4[%c0_10, %c0_11] : memref<16x128xf32, #tpu.memory_space<vmem>>, vector<16x128xf32>
    tpu.vector_store %arg4[%c0_10, %c0_11], %27 {strides = array<i32>} : memref<16x128xf32, #tpu.memory_space<vmem>>, vector<16x128xf32>,
    return
  }
  func.func @transform_0(%arg0: i32) -> (i32, i32) {
    %c0_i32 = arith.constant 0 : i32
    %c0_i32_0 = arith.constant 0 : i32
    return %arg0, %c0_i32 : i32, i32
  }
  func.func @transform_1(%arg0: i32) -> (i32, i32) {
    %c0_i32 = arith.constant 0 : i32
    %c0_i32_0 = arith.constant 0 : i32
    %c0_i32_1 = arith.constant 0 : i32
    return %c0_i32, %c0_i32_0 : i32, i32
  }
  func.func @transform_2(%arg0: i32) -> (i32, i32) {
    %c0_i32 = arith.constant 0 : i32
    %c0_i32_0 = arith.constant 0 : i32
    %c0_i32_1 = arith.constant 0 : i32
    return %c0_i32, %c0_i32_0 : i32, i32
  }
  func.func @transform_3(%arg0: i32) -> (i32, i32) {
    %c0_i32 = arith.constant 0 : i32
    %c0_i32_0 = arith.constant 0 : i32
    return %arg0, %c0_i32 : i32, i32
  }
}

</mosaic_0001>

<llo_original>
// kernel: tpu_custom_call.1
$region0: #{tpu_custom_call.1}
  #allocation0 [shape = 'u32[]', space=smem, size = 0x4, offset = 0x4, fixed_abs, tag = 'smem constant byte address 0x4 - core index']
  #allocation1 [shape = 'u32[72,128]{1,0:T(1,128)}', space=vmem, size = 0x9000, scoped, tag = 'internal scratch']
  %s0 = inlined_call_operand.hbm [shape: f32[16,128], index: 0, kind: input, shape index: {}]
  %s1 = inlined_call_operand.hbm [shape: f32[1,128], index: 1, kind: input, shape index: {}]
  %s2 = inlined_call_operand.vmem [shape: f32[1,128], index: 2, kind: input, shape index: {}]
  %s3 = inlined_call_operand.hbm [shape: f32[16,128], index: 3, kind: output, shape index: {}]
  %s4 = sld [smem:[#allocation0]]
  $region30: #{tpu_custom_call.1} parent=0
    _
  %s6 = ssub.s32 1, %s4
  %s7 = scalar_select 0, %s6, %s4
  $region1: #{tpu_custom_call.1} parent=0
    #allocation2 [shape = 'u8[8192]{0}', space=vmem, size = 0x2000, scoped, tag = 'input window, operand 0, single buffered']
    #allocation3 [shape = 's32[1]{0}', space=sflag, size = 0x4, scoped, tag = 'scoped memory for tpu_custom_call.1']
    #allocation4 [shape = 's32[1]{0}', space=sflag, size = 0x4, scoped, tag = 'scoped memory for tpu_custom_call.1']
    #allocation5 [shape = 'u8[512]{0}', space=vmem, size = 0x400, scoped, tag = 'input window, operand 1, single buffered']
    #allocation6 [shape = 's32[1]{0}', space=sflag, size = 0x4, scoped, tag = 'scoped memory for tpu_custom_call.1']
    #allocation7 [shape = 'u8[8192]{0}', space=vmem, size = 0x2000, scoped, tag = 'output window, operand 0, single buffered']
    %8 = vsyncpa [#allocation3], 0
    %9 = vsyncpa [#allocation6], 0
    %10 = vsyncpa [#allocation4], 0
    // Predicated region
    $region2: #{tpu_custom_call.1} parent=1 // pred_check
      _
    $region3: #{tpu_custom_call.1} parent=1 // pred_check_branch
      %12 = sbr.rel (0) target = $region5
    $region4: #{tpu_custom_call.1} parent=1 // pred_region
      %14 = vsyncadd [#allocation3], 0
      %s15 = sshll.u32 %s0, 4
      %s16 = int_to_ptr.hbm [resolvable:$true] %s15
      %s17 = sshll.u32 [#allocation2], 4
      %s18 = int_to_ptr.vmem [resolvable:$true] %s17
      %23 = dma.hbm_to_vmem [thread:$0]  %s16, 256, %s18, [#allocation3], 128, 128, 8
    $region5: #{tpu_custom_call.1} parent=1 // pred_fallthru
      _
    // Predicated region
    $region6: #{tpu_custom_call.1} parent=1 // pred_check
      _
    $region7: #{tpu_custom_call.1} parent=1 // pred_check_branch
      %25 = sbr.rel (0) target = $region9
    $region8: #{tpu_custom_call.1} parent=1 // pred_region
      %27 = vsyncadd [#allocation6], 0
      %s29 = sshll.u32 %s1, 4
      %s30 = int_to_ptr.hbm [resolvable:$true] %s29
      %s31 = sshll.u32 [#allocation5], 4
      %s32 = int_to_ptr.vmem [resolvable:$true] %s31
      %34 = dma.hbm_to_vmem [thread:$0]  %s30, 16, %s32, [#allocation6]
    $region9: #{tpu_custom_call.1} parent=1 // pred_fallthru
      _
    // Predicated region
    $region10: #{tpu_custom_call.1} parent=1 // pred_check
      _
    $region11: #{tpu_custom_call.1} parent=1 // pred_check_branch
      %36 = sbr.rel (0) target = $region13
    $region12: #{tpu_custom_call.1} parent=1 // pred_region
      _
    $region13: #{tpu_custom_call.1} parent=1 // pred_fallthru
      _
    // Predicated region
    $region14: #{tpu_custom_call.1} parent=1 // pred_check
      _
    $region15: #{tpu_custom_call.1} parent=1 // pred_check_branch
      %38 = sbr.rel (0) target = $region17
    $region16: #{tpu_custom_call.1} parent=1 // pred_region
      %40 = dma.done [#allocation3], 256
    $region17: #{tpu_custom_call.1} parent=1 // pred_fallthru
      _
    // Predicated region
    $region18: #{tpu_custom_call.1} parent=1 // pred_check
      _
    $region19: #{tpu_custom_call.1} parent=1 // pred_check_branch
      %42 = sbr.rel (0) target = $region21
    $region20: #{tpu_custom_call.1} parent=1 // pred_region
      %44 = dma.done [#allocation6], 16
    $region21: #{tpu_custom_call.1} parent=1 // pred_fallthru
      _
    %v45 = vld [vmem:[#allocation2] sm:$0xff]
    %v46 = vld [vmem:[#allocation2 + $0x8] sm:$0xff]
    %47 = vadd.xlane.f32.xlu0 %v45
    %v48 = vpop.xlane.xlu0 %47
    %49 = vadd.xlane.f32.xlu0 %v46
    %v50 = vpop.xlane.xlu0 %49
    %v51 = vmul.f32 %v45, %v45
    %v52 = vmul.f32 %v46, %v46
    %53 = vadd.xlane.f32.xlu0 %v51
    %v54 = vpop.xlane.xlu0 %53
    %55 = vadd.xlane.f32.xlu0 %v52
    %v56 = vpop.xlane.xlu0 %55
    %v57 = vmul.f32 %v48, 0.0078125
    %v58 = vmul.f32 %v50, 0.0078125
    %v59 = vmul.f32 %v57, %v48
    %v60 = vmul.f32 %v58, %v50
    %v61 = vsub.f32 %v54, %v59
    %v62 = vsub.f32 %v56, %v60
    %v63 = vmax.f32 %v61, 0.0
    %v64 = vmax.f32 %v62, 0.0
    %v65 = vmul.f32 %v63, 0.007874016
    %v66 = vmul.f32 %v64, 0.007874016
    %v67 = vrsqrt.pop %v65
    %v68 = vmul.f32 %v67, %v65
    %v69 = vmul.f32 %v68, %v67
    %v70 = vmul.f32 0.5, %v69
    %v71 = vsub.f32 1.5, %v70
    %v72 = vmul.f32 %v67, %v71
    %v73 = vmul.f32 %v65, %v72
    %vm74 = vcmp.eq.f32.partialorder %v65, inf
    %v75 = vsel %vm74, %v65, %v73
    %vm76 = vcmp.eq.f32.partialorder %v65, 0.0
    %v77 = vand.u32 %v65, 2147483648
    %v78 = vsel %vm76, %v77, %v75
    %v79 = vrsqrt.pop %v66
    %v80 = vmul.f32 %v79, %v66
    %v81 = vmul.f32 %v80, %v79
    %v82 = vmul.f32 0.5, %v81
    %v83 = vsub.f32 1.5, %v82
    %v84 = vmul.f32 %v79, %v83
    %v85 = vmul.f32 %v66, %v84
    %vm86 = vcmp.eq.f32.partialorder %v66, inf
    %v87 = vsel %vm86, %v66, %v85
    %vm88 = vcmp.eq.f32.partialorder %v66, 0.0
    %v89 = vand.u32 %v66, 2147483648
    %v90 = vsel %vm88, %v89, %v87
    %v91 = vadd.f32 %v78, 1e-06
    %v92 = vadd.f32 %v90, 1e-06
    %v93 = vrcp.pop %v91
    %v94 = vmul.f32 %v91, %v93
    %v95 = vsub.f32 1.0, %v94
    %v96 = vmul.f32 %v93, %v95
    %v97 = vadd.f32 %v93, %v96
    %vm98 = vweird.f32 %v91
    %vm99 = vweird.f32 %v93
    %vm100 = vmor %vm98, %vm99
    %v101 = vsel %vm100, %v93, %v97
    %v102 = vand.u32 2147483647, %v91
    %vm103 = vcmp.eq.f32.partialorder %v102, 8.507059e+37
    %v104 = vand.u32 %v91, 2147483648
    %v105 = vor.u32 1.1754944e-38, %v104
    %v106 = vsel %vm103, %v105, %v101
    %v107 = vrcp.pop %v92
    %v108 = vmul.f32 %v92, %v107
    %v109 = vsub.f32 1.0, %v108
    %v110 = vmul.f32 %v107, %v109
    %v111 = vadd.f32 %v107, %v110
    %vm112 = vweird.f32 %v92
    %vm113 = vweird.f32 %v107
    %vm114 = vmor %vm112, %vm113
    %v115 = vsel %vm114, %v107, %v111
    %v116 = vand.u32 2147483647, %v92
    %vm117 = vcmp.eq.f32.partialorder %v116, 8.507059e+37
    %v118 = vand.u32 %v92, 2147483648
    %v119 = vor.u32 1.1754944e-38, %v118
    %v120 = vsel %vm117, %v119, %v115
    %v121 = vld [vmem:[#allocation5] sm:$0x1]
    %v122 = vld [vmem:[%s2] sm:$0x1]
    %v123 = vsub.f32 %v45, %v57
    %v124 = vsub.f32 %v46, %v58
    %v125 = vmul.f32 %v123, %v106
    %v126 = vmul.f32 %v124, %v120
    %v128 = vperm.slane %v121, 0
    %v130 = vmul.f32 %v128, %v125
    %v131 = vmul.f32 %v128, %v126
    %v133 = vperm.slane %v122, 0
    %v135 = vadd.f32 %v130, %v133
    %v136 = vadd.f32 %v131, %v133
    %137 = vst [vmem:[#allocation7] sm:$0xff] %v135
    %138 = vst [vmem:[#allocation7 + $0x8] sm:$0xff] %v136
    // Predicated region
    $region22: #{tpu_custom_call.1} parent=1 // pred_check
      _
    $region23: #{tpu_custom_call.1} parent=1 // pred_check_branch
      %140 = sbr.rel (0) target = $region25
    $region24: #{tpu_custom_call.1} parent=1 // pred_region
      %142 = vsyncadd [#allocation4], 0
      %s143 = sshll.u32 [#allocation7], 4
      %s144 = int_to_ptr.vmem [resolvable:$true] %s143
      %s145 = sshll.u32 %s3, 4
      %s146 = int_to_ptr.hbm [resolvable:$true] %s145
      %151 = dma.vmem_to_hbm [thread:$0]  %s144, 256, %s146, [#allocation4], 128, 128, 8
    $region25: #{tpu_custom_call.1} parent=1 // pred_fallthru
      _
    // Predicated region
    $region26: #{tpu_custom_call.1} parent=1 // pred_check
      _
    $region27: #{tpu_custom_call.1} parent=1 // pred_check_branch
      %153 = sbr.rel (0) target = $region29
    $region28: #{tpu_custom_call.1} parent=1 // pred_region
      %155 = dma.done [#allocation4], 256
    $region29: #{tpu_custom_call.1} parent=1 // pred_fallthru
      _
    %156 = vsyncpa [#allocation3], 1
    %157 = vsyncpa [#allocation6], 1
    %158 = vsyncpa [#allocation4], 1

</llo_original>
